<compile_context>
chip_gen: v7x
topology: tpu7x:2x2x1
jax: 0.10.0
libtpu: 0.0.40
codegen_flags: <defaults>
</compile_context>

<pallas_src>
import functools

import jax
import jax.numpy as jnp
from jax.experimental import pallas as pl
from jax.experimental.pallas import tpu as pltpu

INPUT_DIM = 5
IN_PAD = 8          # 5 padded to 8 for clean sublane layout
HIDDEN = 64
OUTPUT_DIM = 1


def _round_up(x, m):
    return (x + m - 1) // m * m


def _mlp_kernel(xT_ref, w1_ref, b1_ref, w2_ref, b2_ref, w3_ref, b3_ref, oT_ref):
    # xT_ref: (IN_PAD, TB) bf16  -- batch on lanes, features on sublanes
    xT = xT_ref[...]

    # layer 1: (64, 8) @ (8, TB) bf16 on MXU, f32 accumulate
    h1 = jnp.dot(w1_ref[...], xT, preferred_element_type=jnp.float32)
    h1 = jnp.maximum(h1 + b1_ref[...], 0.0)               # f32 bias + ReLU (VPU)

    # layer 2: (64, 64) @ (64, TB) bf16 on MXU, f32 accumulate
    h2 = jnp.dot(w2_ref[...], h1.astype(jnp.bfloat16),
                 preferred_element_type=jnp.float32)
    h2 = jnp.maximum(h2 + b2_ref[...], 0.0)

    # layer 3 (64 -> 1): VPU multiply + sublane reduction (keeps the M=1 pass
    # off the MXU); result (1, TB) is lane-dense.
    y = jnp.sum(h2 * w3_ref[...], axis=0, keepdims=True) + b3_ref[...]
    oT_ref[...] = y.astype(oT_ref.dtype)


@functools.partial(jax.jit, static_argnames=())
def drl_model_forward(x, params):
    """x: (B, INPUT_DIM) f32. params: PyTorch-layout w1/b1/w2/b2/w3/b3."""
    B = x.shape[0]
    TB = min(512, _round_up(max(B, 1), 128))     # lane-aligned batch tile
    B_pad = _round_up(B, TB)

    bf = jnp.bfloat16
    # Input: pad features 5->8, pad batch, transpose to (IN_PAD, B_pad), bf16.
    xT = jnp.zeros((IN_PAD, B_pad), bf)
    xT = xT.at[:INPUT_DIM, :B].set(x.astype(bf).T)

    # Weights already in (out, in) PyTorch layout == what the transposed kernel needs.
    w1T = jnp.zeros((HIDDEN, IN_PAD), bf).at[:, :INPUT_DIM].set(params["w1"].astype(bf))
    w2T = params["w2"].astype(bf)                               # (64, 64)
    w3c = params["w3"].astype(jnp.float32).reshape(HIDDEN, 1)   # (64, 1) column
    b1c = params["b1"].astype(jnp.float32).reshape(HIDDEN, 1)
    b2c = params["b2"].astype(jnp.float32).reshape(HIDDEN, 1)
    b3c = params["b3"].astype(jnp.float32).reshape(1, 1)

    const = lambda i: (0, 0)      # weights/biases VMEM-resident across grid steps
    outT = pl.pallas_call(
        _mlp_kernel,
        out_shape=jax.ShapeDtypeStruct((OUTPUT_DIM, B_pad), jnp.float32),
        grid=(B_pad // TB,),
        in_specs=[
            pl.BlockSpec((IN_PAD, TB), lambda i: (0, i)),   # x tile (batch-tiled)
            pl.BlockSpec((HIDDEN, IN_PAD), const),          # w1
            pl.BlockSpec((HIDDEN, 1), const),               # b1
            pl.BlockSpec((HIDDEN, HIDDEN), const),          # w2
            pl.BlockSpec((HIDDEN, 1), const),               # b2
            pl.BlockSpec((HIDDEN, 1), const),               # w3 (column)
            pl.BlockSpec((1, 1), const),                    # b3
        ],
        out_specs=pl.BlockSpec((OUTPUT_DIM, TB), lambda i: (0, i)),  # lane-dense
        compiler_params=pltpu.CompilerParams(
            dimension_semantics=("parallel",)),             # megacore on v7x
    )(xT, w1T, b1c, w2T, b2c, w3c, b3c)

    return outT[:, :B].T                                    # (B, OUTPUT_DIM) f32


def init_params(key):
    """nn.Linear-style init: w (out, in), b (out,), U(-1/sqrt(fan_in), 1/sqrt(fan_in))."""
    ks = jax.random.split(key, 6)

    def linear(kw, kb, fan_in, fan_out):
        bound = 1.0 / float(fan_in) ** 0.5
        w = jax.random.uniform(kw, (fan_out, fan_in), jnp.float32, -bound, bound)
        b = jax.random.uniform(kb, (fan_out,), jnp.float32, -bound, bound)
        return w, b

    w1, b1 = linear(ks[0], ks[1], INPUT_DIM, HIDDEN)
    w2, b2 = linear(ks[2], ks[3], HIDDEN, HIDDEN)
    w3, b3 = linear(ks[4], ks[5], HIDDEN, OUTPUT_DIM)
    return {"w1": w1, "b1": b1, "w2": w2, "b2": b2, "w3": w3, "b3": b3}


def _reference(x, p):
    """Plain-JAX reference using the same bf16-operand / f32-accumulate math."""
    bf = jnp.bfloat16
    h1 = jnp.maximum(
        jnp.dot(x.astype(bf), p["w1"].astype(bf).T,
                preferred_element_type=jnp.float32) + p["b1"], 0.0)
    h2 = jnp.maximum(
        jnp.dot(h1.astype(bf), p["w2"].astype(bf).T,
                preferred_element_type=jnp.float32) + p["b2"], 0.0)
    return jnp.dot(h2, p["w3"].astype(jnp.float32).T) + p["b3"]


if __name__ == "__main__":
    key = jax.random.PRNGKey(0)
    kx, kp = jax.random.split(key)
    batch = 8
    x = jax.random.normal(kx, (batch, INPUT_DIM), jnp.float32)
    params = init_params(kp)

    out = jax.block_until_ready(drl_model_forward(x, params))
    ref = _reference(x, params)

    assert out.shape == (batch, OUTPUT_DIM), out.shape
    assert jnp.allclose(out, ref, atol=2e-3, rtol=2e-3), (out, ref)
    print("KERNEL_OK")
</pallas_src>

<mosaic_0001>
module attributes {stable_mosaic.version = 11 : i64} {
  func.func @_mlp_kernel(%arg0: i32, %arg1: memref<8x128xbf16, #tpu.memory_space<vmem>>, %arg2: memref<64x8xbf16, #tpu.memory_space<vmem>>, %arg3: memref<64x1xf32, #tpu.memory_space<vmem>>, %arg4: memref<64x64xbf16, #tpu.memory_space<vmem>>, %arg5: memref<64x1xf32, #tpu.memory_space<vmem>>, %arg6: memref<64x1xf32, #tpu.memory_space<vmem>>, %arg7: memref<1x1xf32, #tpu.memory_space<vmem>>, %arg8: memref<1x128xf32, #tpu.memory_space<vmem>>) attributes {dimension_semantics = [#tpu.dimension_semantics<parallel>], iteration_bounds = array<i64: 1>, scalar_prefetch = 0 : i64, scratch_operands = 0 : i64, tpu.core_type = #tpu.core_type<tc>, window_params = [{transform_indices = @transform_0, window_bounds = array<i64: 8, 128>}, {pipeline_mode = #tpu.pipeline_mode<synchronous>, transform_indices = @transform_1, window_bounds = array<i64: 64, 8>}, {pipeline_mode = #tpu.pipeline_mode<synchronous>, transform_indices = @transform_2, window_bounds = array<i64: 64, 1>}, {pipeline_mode = #tpu.pipeline_mode<synchronous>, transform_indices = @transform_3, window_bounds = array<i64: 64, 64>}, {pipeline_mode = #tpu.pipeline_mode<synchronous>, transform_indices = @transform_4, window_bounds = array<i64: 64, 1>}, {pipeline_mode = #tpu.pipeline_mode<synchronous>, transform_indices = @transform_5, window_bounds = array<i64: 64, 1>}, {pipeline_mode = #tpu.pipeline_mode<synchronous>, transform_indices = @transform_6, window_bounds = array<i64: 1, 1>}, {transform_indices = @transform_7, window_bounds = array<i64: 1, 128>}]} {
    %c0 = arith.constant 0 : index
    %c0_0 = arith.constant 0 : index
    %0 = vector.load %arg1[%c0, %c0_0] : memref<8x128xbf16, #tpu.memory_space<vmem>>, vector<8x128xbf16>
    %c0_1 = arith.constant 0 : index
    %c0_2 = arith.constant 0 : index
    %1 = vector.load %arg2[%c0_1, %c0_2] : memref<64x8xbf16, #tpu.memory_space<vmem>>, vector<64x8xbf16>
    %cst = arith.constant dense<0.000000e+00> : vector<64x128xf32>
    %2 = tpu.matmul %1, %0, %cst {dimension_numbers = #tpu.dot_dimension_numbers<[1], [0], [0], [1], [0, 0, 1, 1], [], []>} : vector<64x8xbf16>, vector<8x128xbf16>, vector<64x128xf32> -> vector<64x128xf32>
    %c0_3 = arith.constant 0 : index
    %c0_4 = arith.constant 0 : index
    %3 = vector.load %arg3[%c0_3, %c0_4] : memref<64x1xf32, #tpu.memory_space<vmem>>, vector<64x1xf32>
    %4 = vector.broadcast %3 : vector<64x1xf32> to vector<64x128xf32>
    %5 = arith.addf %2, %4 : vector<64x128xf32>
    %cst_5 = arith.constant 0.000000e+00 : f32
    %6 = vector.broadcast %cst_5 : f32 to vector<64x128xf32>
    %7 = arith.maximumf %5, %6 : vector<64x128xf32>
    %c0_6 = arith.constant 0 : index
    %c0_7 = arith.constant 0 : index
    %8 = vector.load %arg4[%c0_6, %c0_7] : memref<64x64xbf16, #tpu.memory_space<vmem>>, vector<64x64xbf16>
    %9 = arith.truncf %7 : vector<64x128xf32> to vector<64x128xbf16>
    %cst_8 = arith.constant dense<0.000000e+00> : vector<64x128xf32>
    %10 = tpu.matmul %8, %9, %cst_8 {dimension_numbers = #tpu.dot_dimension_numbers<[1], [0], [0], [1], [0, 0, 1, 1], [], []>} : vector<64x64xbf16>, vector<64x128xbf16>, vector<64x128xf32> -> vector<64x128xf32>
    %c0_9 = arith.constant 0 : index
    %c0_10 = arith.constant 0 : index
    %11 = vector.load %arg5[%c0_9, %c0_10] : memref<64x1xf32, #tpu.memory_space<vmem>>, vector<64x1xf32>
    %12 = vector.broadcast %11 : vector<64x1xf32> to vector<64x128xf32>
    %13 = arith.addf %10, %12 : vector<64x128xf32>
    %cst_11 = arith.constant 0.000000e+00 : f32
    %14 = vector.broadcast %cst_11 : f32 to vector<64x128xf32>
    %15 = arith.maximumf %13, %14 : vector<64x128xf32>
    %c0_12 = arith.constant 0 : index
    %c0_13 = arith.constant 0 : index
    %16 = vector.load %arg6[%c0_12, %c0_13] : memref<64x1xf32, #tpu.memory_space<vmem>>, vector<64x1xf32>
    %17 = vector.broadcast %16 : vector<64x1xf32> to vector<64x128xf32>
    %18 = arith.mulf %15, %17 : vector<64x128xf32>
    %cst_14 = arith.constant dense<0.000000e+00> : vector<128xf32>
    %19 = vector.multi_reduction <add>, %18, %cst_14 [0] : vector<64x128xf32> to vector<128xf32>
    %20 = vector.shape_cast %19 : vector<128xf32> to vector<1x128xf32>
    %c0_15 = arith.constant 0 : index
    %c0_16 = arith.constant 0 : index
    %21 = vector.load %arg7[%c0_15, %c0_16] : memref<1x1xf32, #tpu.memory_space<vmem>>, vector<1x1xf32>
    %22 = vector.broadcast %21 : vector<1x1xf32> to vector<1x128xf32>
    %23 = arith.addf %20, %22 : vector<1x128xf32>
    %c0_17 = arith.constant 0 : index
    %c0_18 = arith.constant 0 : index
    %24 = vector.load %arg8[%c0_17, %c0_18] : memref<1x128xf32, #tpu.memory_space<vmem>>, vector<1x128xf32>
    tpu.vector_store %arg8[%c0_17, %c0_18], %23 {strides = array<i32>} : memref<1x128xf32, #tpu.memory_space<vmem>>, vector<1x128xf32>,
    return
  }
  func.func @transform_0(%arg0: i32) -> (i32, i32) {
    %c0_i32 = arith.constant 0 : i32
    %c0_i32_0 = arith.constant 0 : i32
    return %c0_i32, %arg0 : i32, i32
  }
  func.func @transform_1(%arg0: i32) -> (i32, i32) {
    %c0_i32 = arith.constant 0 : i32
    %c0_i32_0 = arith.constant 0 : i32
    %c0_i32_1 = arith.constant 0 : i32
    return %c0_i32, %c0_i32_0 : i32, i32
  }
  func.func @transform_2(%arg0: i32) -> (i32, i32) {
    %c0_i32 = arith.constant 0 : i32
    %c0_i32_0 = arith.constant 0 : i32
    %c0_i32_1 = arith.constant 0 : i32
    return %c0_i32, %c0_i32_0 : i32, i32
  }
  func.func @transform_3(%arg0: i32) -> (i32, i32) {
    %c0_i32 = arith.constant 0 : i32
    %c0_i32_0 = arith.constant 0 : i32
    %c0_i32_1 = arith.constant 0 : i32
    return %c0_i32, %c0_i32_0 : i32, i32
  }
  func.func @transform_4(%arg0: i32) -> (i32, i32) {
    %c0_i32 = arith.constant 0 : i32
    %c0_i32_0 = arith.constant 0 : i32
    %c0_i32_1 = arith.constant 0 : i32
    return %c0_i32, %c0_i32_0 : i32, i32
  }
  func.func @transform_5(%arg0: i32) -> (i32, i32) {
    %c0_i32 = arith.constant 0 : i32
    %c0_i32_0 = arith.constant 0 : i32
    %c0_i32_1 = arith.constant 0 : i32
    return %c0_i32, %c0_i32_0 : i32, i32
  }
  func.func @transform_6(%arg0: i32) -> (i32, i32) {
    %c0_i32 = arith.constant 0 : i32
    %c0_i32_0 = arith.constant 0 : i32
    %c0_i32_1 = arith.constant 0 : i32
    return %c0_i32, %c0_i32_0 : i32, i32
  }
  func.func @transform_7(%arg0: i32) -> (i32, i32) {
    %c0_i32 = arith.constant 0 : i32
    %c0_i32_0 = arith.constant 0 : i32
    return %c0_i32, %arg0 : i32, i32
  }
}

</mosaic_0001>

<llo_original>
// kernel: drl_model_forward.1
$region0: #{drl_model_forward.1}
  #allocation0 [shape = 'u32[]', space=smem, size = 0x4, offset = 0x4, fixed_abs, tag = 'smem constant byte address 0x4 - core index']
  #allocation1 [shape = 'u32[144,128]{1,0:T(1,128)}', space=vmem, size = 0x12000, scoped, tag = 'internal scratch']
  #allocation2 [shape = 'f32[1,1]{1,0:T(1,128)S(1)}', space=vmem, size = 0x200, scoped, tag = 'scoped memory for drl_model_forward.1']
  %s0 = inlined_call_operand.vmem [shape: bf16[8,128], index: 0, kind: input, shape index: {}]
  %s1 = inlined_call_operand.vmem [shape: bf16[64,8], index: 1, kind: input, shape index: {}]
  %s2 = inlined_call_operand.vmem [shape: f32[64,1], index: 2, kind: input, shape index: {}]
  %s3 = inlined_call_operand.vmem [shape: bf16[64,64], index: 3, kind: input, shape index: {}]
  %s4 = inlined_call_operand.vmem [shape: f32[64,1], index: 4, kind: input, shape index: {}]
  %s5 = inlined_call_operand.vmem [shape: f32[64,1], index: 5, kind: input, shape index: {}]
  %s6 = inlined_call_operand.<no memory space> [shape: f32[1,1], index: 6, kind: input, shape index: {}]
  %s7 = inlined_call_operand.vmem [shape: f32[1,128], index: 7, kind: output, shape index: {}]
  %s8 = sld [smem:[#allocation0]]
  $region38: #{drl_model_forward.1} parent=0
    _
  %s10 = ssub.s32 1, %s8
  %s11 = scalar_select 0, %s10, %s8
  %v12 = vstv %s6
  %13 = vst [vmem:[#allocation2] sm:$0x1] %v12
  // Predicated region
  $region2: #{drl_model_forward.1} parent=0 // pred_check
    _
  $region3: #{drl_model_forward.1} parent=0 // pred_check_branch
    %15 = sbr.rel (0) target = $region5
  $region4: #{drl_model_forward.1} parent=0 // pred_region
    _
  $region5: #{drl_model_forward.1} parent=0 // pred_fallthru
    _
  // Predicated region
  $region6: #{drl_model_forward.1} parent=0 // pred_check
    _
  $region7: #{drl_model_forward.1} parent=0 // pred_check_branch
    %17 = sbr.rel (0) target = $region9
  $region8: #{drl_model_forward.1} parent=0 // pred_region
    _
  $region9: #{drl_model_forward.1} parent=0 // pred_fallthru
    _
  // Predicated region
  $region10: #{drl_model_forward.1} parent=0 // pred_check
    _
  $region11: #{drl_model_forward.1} parent=0 // pred_check_branch
    %19 = sbr.rel (0) target = $region13
  $region12: #{drl_model_forward.1} parent=0 // pred_region
    _
  $region13: #{drl_model_forward.1} parent=0 // pred_fallthru
    _
  // Predicated region
  $region14: #{drl_model_forward.1} parent=0 // pred_check
    _
  $region15: #{drl_model_forward.1} parent=0 // pred_check_branch
    %21 = sbr.rel (0) target = $region17
  $region16: #{drl_model_forward.1} parent=0 // pred_region
    _
  $region17: #{drl_model_forward.1} parent=0 // pred_fallthru
    _
  // Predicated region
  $region18: #{drl_model_forward.1} parent=0 // pred_check
    _
  $region19: #{drl_model_forward.1} parent=0 // pred_check_branch
    %23 = sbr.rel (0) target = $region21
  $region20: #{drl_model_forward.1} parent=0 // pred_region
    _
  $region21: #{drl_model_forward.1} parent=0 // pred_fallthru
    _
  // Predicated region
  $region22: #{drl_model_forward.1} parent=0 // pred_check
    _
  $region23: #{drl_model_forward.1} parent=0 // pred_check_branch
    %25 = sbr.rel (0) target = $region25
  $region24: #{drl_model_forward.1} parent=0 // pred_region
    _
  $region25: #{drl_model_forward.1} parent=0 // pred_fallthru
    _
  // Predicated region
  $region26: #{drl_model_forward.1} parent=0 // pred_check
    _
  $region27: #{drl_model_forward.1} parent=0 // pred_check_branch
    %27 = sbr.rel (0) target = $region29
  $region28: #{drl_model_forward.1} parent=0 // pred_region
    _
  $region29: #{drl_model_forward.1} parent=0 // pred_fallthru
    _
  %v29 = vld [vmem:[%s0] sm:$0xf]
  %v30 = vld [vmem:[%s1] sm:$0xf]
  %v31 = vld [vmem:[%s1 + $0x4] sm:$0xf]
  %v32 = vld [vmem:[%s1 + $0x8] sm:$0xf]
  %v33 = vld [vmem:[%s1 + $0xc] sm:$0xf]
  %v34 = vld [vmem:[%s1 + $0x10] sm:$0xf]
  %v35 = vld [vmem:[%s1 + $0x14] sm:$0xf]
  %v36 = vld [vmem:[%s1 + $0x18] sm:$0xf]
  %v37 = vld [vmem:[%s1 + $0x1c] sm:$0xf]
  %v38 = vld [vmem:[%s2] sm:$0xff]
  %v39 = vld [vmem:[%s2 + $0x8] sm:$0xff]
  %v40 = vld [vmem:[%s2 + $0x10] sm:$0xff]
  %v41 = vld [vmem:[%s2 + $0x18] sm:$0xff]
  %v42 = vld [vmem:[%s2 + $0x20] sm:$0xff]
  %v43 = vld [vmem:[%s2 + $0x28] sm:$0xff]
  %v44 = vld [vmem:[%s2 + $0x30] sm:$0xff]
  %v45 = vld [vmem:[%s2 + $0x38] sm:$0xff]
  %47 = vset.pattern.permute.xlu0 0
  %48 = vperm.xlu0 %47, %v38
  %v49 = vpop.permute.xlu0 %48
  %52 = vset.pattern.permute.xlu0 0
  %53 = vperm.xlu0 %52, %v39
  %v54 = vpop.permute.xlu0 %53
  %57 = vset.pattern.permute.xlu0 0
  %58 = vperm.xlu0 %57, %v40
  %v59 = vpop.permute.xlu0 %58
  %62 = vset.pattern.permute.xlu0 0
  %63 = vperm.xlu0 %62, %v41
  %v64 = vpop.permute.xlu0 %63
  %67 = vset.pattern.permute.xlu0 0
  %68 = vperm.xlu0 %67, %v42
  %v69 = vpop.permute.xlu0 %68
  %72 = vset.pattern.permute.xlu0 0
  %73 = vperm.xlu0 %72, %v43
  %v74 = vpop.permute.xlu0 %73
  %77 = vset.pattern.permute.xlu0 0
  %78 = vperm.xlu0 %77, %v44
  %v79 = vpop.permute.xlu0 %78
  %82 = vset.pattern.permute.xlu0 0
  %83 = vperm.xlu0 %82, %v45
  %v84 = vpop.permute.xlu0 %83
  %v94 = vunpack.c.l.b16 %v30
  %v95 = vunpack.c.l.b16 %v31
  %v96 = vunpack.c.l.b16 %v32
  %v97 = vunpack.c.l.b16 %v33
  %v98 = vunpack.c.l.b16 %v34
  %v99 = vunpack.c.l.b16 %v35
  %v100 = vunpack.c.l.b16 %v36
  %v101 = vunpack.c.l.b16 %v37
  %v102 = vpack.c.b16 %v95, %v94
  %v103 = vpack.c.b16 %v97, %v96
  %v104 = vpack.c.b16 %v99, %v98
  %v105 = vpack.c.b16 %v101, %v100
  %vm106 = vcmask 64512
  %v108 = vsel %vm106, %v102, 0
  %v111 = vsel %vm106, %v103, 0
  %v114 = vsel %vm106, %v104, 0
  %v117 = vsel %vm106, %v105, 0
  %vm119 = vcmask 1043456
  %v121 = vsel %vm119, %v29, 0
  %123 = vmatprep.subr.bf16.mxu0 0
  %124 = vmatpush1.bf16.msra.mxu0 %v121
  %125 = vmatprep.subr.bf16.mxu0 0
  %126 = vmatpush1.bf16.msra.mxu0 0
  %127 = vmatprep.subr.bf16.mxu0 0
  %128 = vmatpush1.bf16.msra.mxu0 0
  %129 = vmatprep.subr.bf16.mxu0 0
  %130 = vmatpush1.bf16.msra.mxu0 0
  %131 = vmatprep.subr.bf16.mxu0 0
  %132 = vmatpush1.bf16.msra.mxu0 0
  %133 = vmatprep.subr.bf16.mxu0 0
  %134 = vmatpush1.bf16.msra.mxu0 0
  %135 = vmatprep.subr.bf16.mxu0 0
  %136 = vmatpush1.bf16.msra.mxu0 0
  %137 = vmatprep.subr.bf16.mxu0 0
  %138 = vmatpush1.bf16.msra.mxu0 0
  %139 = vmatprep.subr.bf16.mxu0 0
  %140 = vmatpush1.bf16.msra.mxu0 0
  %141 = vmatprep.subr.bf16.mxu0 0
  %142 = vmatpush1.bf16.msra.mxu0 0
  %143 = vmatprep.subr.bf16.mxu0 0
  %144 = vmatpush1.bf16.msra.mxu0 0
  %145 = vmatprep.subr.bf16.mxu0 0
  %146 = vmatpush1.bf16.msra.mxu0 0
  %147 = vmatprep.subr.bf16.mxu0 0
  %148 = vmatpush1.bf16.msra.mxu0 0
  %149 = vmatprep.subr.bf16.mxu0 0
  %150 = vmatpush1.bf16.msra.mxu0 0
  %151 = vmatprep.subr.bf16.mxu0 0
  %152 = vmatpush1.bf16.msra.mxu0 0
  %153 = vmatprep.subr.bf16.mxu0 0
  %154 = vmatpush1.bf16.msra.mxu0 0
  %155 = vmatprep.mubr.bf16.mxu0 0
  %156 = vmatmul.mubr.bf16.gmra.mrb[0].mxu0 %v108
  %v157 = vpop.f32.mrb[0].mxu0
  %v158 = vadd.f32 %v49, %v157
  %v159 = vpop.f32.mrb[0].mxu0
  %v160 = vpop.f32.mrb[0].mxu0
  %v161 = vadd.f32 %v54, %v160
  %v162 = vpop.f32.mrb[0].mxu0
  %163 = vmatprep.mubr.bf16.mxu0 0
  %164 = vmatmul.mubr.bf16.gmra.mrb[0].mxu0 %v111
  %v165 = vpop.f32.mrb[0].mxu0
  %v166 = vadd.f32 %v59, %v165
  %v167 = vpop.f32.mrb[0].mxu0
  %v168 = vpop.f32.mrb[0].mxu0
  %v169 = vadd.f32 %v64, %v168
  %v170 = vpop.f32.mrb[0].mxu0
  %171 = vmatprep.mubr.bf16.mxu0 0
  %172 = vmatmul.mubr.bf16.gmra.mrb[0].mxu0 %v114
  %v173 = vpop.f32.mrb[0].mxu0
  %v174 = vadd.f32 %v69, %v173
  %v175 = vpop.f32.mrb[0].mxu0
  %v176 = vpop.f32.mrb[0].mxu0
  %v177 = vadd.f32 %v74, %v176
  %v178 = vpop.f32.mrb[0].mxu0
  %179 = vmatprep.mubr.bf16.mxu0 0
  %180 = vmatmul.mubr.bf16.gmra.mrb[0].mxu0 %v117
  %v181 = vpop.f32.mrb[0].mxu0
  %v182 = vadd.f32 %v79, %v181
  %v183 = vpop.f32.mrb[0].mxu0
  %v184 = vpop.f32.mrb[0].mxu0
  %v185 = vadd.f32 %v84, %v184
  %v186 = vpop.f32.mrb[0].mxu0
  %187 = vdwg.mxu0
  %v188 = vmax.f32 %v158, 0.0
  %v189 = vmax.f32 %v161, 0.0
  %v190 = vmax.f32 %v166, 0.0
  %v191 = vmax.f32 %v169, 0.0
  %v192 = vmax.f32 %v174, 0.0
  %v193 = vmax.f32 %v177, 0.0
  %v194 = vmax.f32 %v182, 0.0
  %v195 = vmax.f32 %v185, 0.0
  %v196 = vld [vmem:[%s3] sm:$0xf]
  %v197 = vld [vmem:[%s3 + $0x4] sm:$0xf]
  %v198 = vld [vmem:[%s3 + $0x8] sm:$0xf]
  %v199 = vld [vmem:[%s3 + $0xc] sm:$0xf]
  %v200 = vld [vmem:[%s3 + $0x10] sm:$0xf]
  %v201 = vld [vmem:[%s3 + $0x14] sm:$0xf]
  %v202 = vld [vmem:[%s3 + $0x18] sm:$0xf]
  %v203 = vld [vmem:[%s3 + $0x1c] sm:$0xf]
  %v204 = vpack.c.bf16 %v189, %v188
  %v205 = vpack.c.bf16 %v191, %v190
  %v206 = vpack.c.bf16 %v193, %v192
  %v207 = vpack.c.bf16 %v195, %v194
  %v208 = vld [vmem:[%s4] sm:$0xff]
  %v209 = vld [vmem:[%s4 + $0x8] sm:$0xff]
  %v210 = vld [vmem:[%s4 + $0x10] sm:$0xff]
  %v211 = vld [vmem:[%s4 + $0x18] sm:$0xff]
  %v212 = vld [vmem:[%s4 + $0x20] sm:$0xff]
  %v213 = vld [vmem:[%s4 + $0x28] sm:$0xff]
  %v214 = vld [vmem:[%s4 + $0x30] sm:$0xff]
  %v215 = vld [vmem:[%s4 + $0x38] sm:$0xff]
  %217 = vset.pattern.permute.xlu0 0
  %218 = vperm.xlu0 %217, %v208
  %v219 = vpop.permute.xlu0 %218
  %222 = vset.pattern.permute.xlu0 0
  %223 = vperm.xlu0 %222, %v209
  %v224 = vpop.permute.xlu0 %223
  %227 = vset.pattern.permute.xlu0 0
  %228 = vperm.xlu0 %227, %v210
  %v229 = vpop.permute.xlu0 %228
  %232 = vset.pattern.permute.xlu0 0
  %233 = vperm.xlu0 %232, %v211
  %v234 = vpop.permute.xlu0 %233
  %237 = vset.pattern.permute.xlu0 0
  %238 = vperm.xlu0 %237, %v212
  %v239 = vpop.permute.xlu0 %238
  %242 = vset.pattern.permute.xlu0 0
  %243 = vperm.xlu0 %242, %v213
  %v244 = vpop.permute.xlu0 %243
  %247 = vset.pattern.permute.xlu0 0
  %248 = vperm.xlu0 %247, %v214
  %v249 = vpop.permute.xlu0 %248
  %252 = vset.pattern.permute.xlu0 0
  %253 = vperm.xlu0 %252, %v215
  %v254 = vpop.permute.xlu0 %253
  %v264 = vunpack.c.l.b16 %v196
  %v265 = vunpack.c.l.b16 %v197
  %v266 = vunpack.c.l.b16 %v198
  %v267 = vunpack.c.l.b16 %v199
  %v268 = vunpack.c.l.b16 %v200
  %v269 = vunpack.c.l.b16 %v201
  %v270 = vunpack.c.l.b16 %v202
  %v271 = vunpack.c.l.b16 %v203
  %v272 = vpack.c.b16 %v265, %v264
  %v273 = vpack.c.b16 %v267, %v266
  %v274 = vpack.c.b16 %v269, %v268
  %v275 = vpack.c.b16 %v271, %v270
  %vm276 = vcmask 523264
  %v278 = vsel %vm276, %v272, 0
  %v281 = vsel %vm276, %v273, 0
  %v284 = vsel %vm276, %v274, 0
  %v287 = vsel %vm276, %v275, 0
  %289 = vmatprep.subr.bf16.mxu0 0
  %290 = vmatpush1.bf16.msra.mxu0 %v204
  %291 = vmatprep.subr.bf16.mxu0 0
  %292 = vmatpush1.bf16.msra.mxu0 %v205
  %293 = vmatprep.subr.bf16.mxu0 0
  %294 = vmatpush1.bf16.msra.mxu0 %v206
  %295 = vmatprep.subr.bf16.mxu0 0
  %296 = vmatpush1.bf16.msra.mxu0 %v207
  %297 = vmatprep.subr.bf16.mxu0 0
  %298 = vmatpush1.bf16.msra.mxu0 0
  %299 = vmatprep.subr.bf16.mxu0 0
  %300 = vmatpush1.bf16.msra.mxu0 0
  %301 = vmatprep.subr.bf16.mxu0 0
  %302 = vmatpush1.bf16.msra.mxu0 0
  %303 = vmatprep.subr.bf16.mxu0 0
  %304 = vmatpush1.bf16.msra.mxu0 0
  %305 = vmatprep.subr.bf16.mxu0 0
  %306 = vmatpush1.bf16.msra.mxu0 0
  %307 = vmatprep.subr.bf16.mxu0 0
  %308 = vmatpush1.bf16.msra.mxu0 0
  %309 = vmatprep.subr.bf16.mxu0 0
  %310 = vmatpush1.bf16.msra.mxu0 0
  %311 = vmatprep.subr.bf16.mxu0 0
  %312 = vmatpush1.bf16.msra.mxu0 0
  %313 = vmatprep.subr.bf16.mxu0 0
  %314 = vmatpush1.bf16.msra.mxu0 0
  %315 = vmatprep.subr.bf16.mxu0 0
  %316 = vmatpush1.bf16.msra.mxu0 0
  %317 = vmatprep.subr.bf16.mxu0 0
  %318 = vmatpush1.bf16.msra.mxu0 0
  %319 = vmatprep.subr.bf16.mxu0 0
  %320 = vmatpush1.bf16.msra.mxu0 0
  %321 = vmatprep.mubr.bf16.mxu0 0
  %322 = vmatmul.mubr.bf16.gmra.mrb[0].mxu0 %v278
  %v323 = vpop.f32.mrb[0].mxu0
  %v324 = vadd.f32 %v219, %v323
  %v325 = vpop.f32.mrb[0].mxu0
  %v326 = vpop.f32.mrb[0].mxu0
  %v327 = vadd.f32 %v224, %v326
  %v328 = vpop.f32.mrb[0].mxu0
  %329 = vmatprep.mubr.bf16.mxu0 0
  %330 = vmatmul.mubr.bf16.gmra.mrb[0].mxu0 %v281
  %v331 = vpop.f32.mrb[0].mxu0
  %v332 = vadd.f32 %v229, %v331
  %v333 = vpop.f32.mrb[0].mxu0
  %v334 = vpop.f32.mrb[0].mxu0
  %v335 = vadd.f32 %v234, %v334
  %v336 = vpop.f32.mrb[0].mxu0
  %337 = vmatprep.mubr.bf16.mxu0 0
  %338 = vmatmul.mubr.bf16.gmra.mrb[0].mxu0 %v284
  %v339 = vpop.f32.mrb[0].mxu0
  %v340 = vadd.f32 %v239, %v339
  %v341 = vpop.f32.mrb[0].mxu0
  %v342 = vpop.f32.mrb[0].mxu0
  %v343 = vadd.f32 %v244, %v342
  %v344 = vpop.f32.mrb[0].mxu0
  %345 = vmatprep.mubr.bf16.mxu0 0
  %346 = vmatmul.mubr.bf16.gmra.mrb[0].mxu0 %v287
  %v347 = vpop.f32.mrb[0].mxu0
  %v348 = vadd.f32 %v249, %v347
  %v349 = vpop.f32.mrb[0].mxu0
  %v350 = vpop.f32.mrb[0].mxu0
  %v351 = vadd.f32 %v254, %v350
  %v352 = vpop.f32.mrb[0].mxu0
  %353 = vdwg.mxu0
  %v354 = vmax.f32 %v324, 0.0
  %v355 = vmax.f32 %v327, 0.0
  %v356 = vmax.f32 %v332, 0.0
  %v357 = vmax.f32 %v335, 0.0
  %v358 = vmax.f32 %v340, 0.0
  %v359 = vmax.f32 %v343, 0.0
  %v360 = vmax.f32 %v348, 0.0
  %v361 = vmax.f32 %v351, 0.0
  %v362 = vld [vmem:[%s5] sm:$0xff]
  %v363 = vld [vmem:[%s5 + $0x8] sm:$0xff]
  %v364 = vld [vmem:[%s5 + $0x10] sm:$0xff]
  %v365 = vld [vmem:[%s5 + $0x18] sm:$0xff]
  %v366 = vld [vmem:[%s5 + $0x20] sm:$0xff]
  %v367 = vld [vmem:[%s5 + $0x28] sm:$0xff]
  %v368 = vld [vmem:[%s5 + $0x30] sm:$0xff]
  %v369 = vld [vmem:[%s5 + $0x38] sm:$0xff]
  %371 = vset.pattern.permute.xlu0 0
  %372 = vperm.xlu0 %371, %v362
  %v373 = vpop.permute.xlu0 %372
  %376 = vset.pattern.permute.xlu0 0
  %377 = vperm.xlu0 %376, %v363
  %v378 = vpop.permute.xlu0 %377
  %381 = vset.pattern.permute.xlu0 0
  %382 = vperm.xlu0 %381, %v364
  %v383 = vpop.permute.xlu0 %382
  %386 = vset.pattern.permute.xlu0 0
  %387 = vperm.xlu0 %386, %v365
  %v388 = vpop.permute.xlu0 %387
  %391 = vset.pattern.permute.xlu0 0
  %392 = vperm.xlu0 %391, %v366
  %v393 = vpop.permute.xlu0 %392
  %396 = vset.pattern.permute.xlu0 0
  %397 = vperm.xlu0 %396, %v367
  %v398 = vpop.permute.xlu0 %397
  %401 = vset.pattern.permute.xlu0 0
  %402 = vperm.xlu0 %401, %v368
  %v403 = vpop.permute.xlu0 %402
  %406 = vset.pattern.permute.xlu0 0
  %407 = vperm.xlu0 %406, %v369
  %v408 = vpop.permute.xlu0 %407
  %v410 = vmul.f32 %v354, %v373
  %v411 = vmul.f32 %v355, %v378
  %v412 = vmul.f32 %v356, %v383
  %v413 = vmul.f32 %v357, %v388
  %v414 = vmul.f32 %v358, %v393
  %v415 = vmul.f32 %v359, %v398
  %v416 = vmul.f32 %v360, %v403
  %v417 = vmul.f32 %v361, %v408
  %v418 = vadd.f32 %v410, %v411
  %v419 = vadd.f32 %v418, %v412
  %v420 = vadd.f32 %v419, %v413
  %v421 = vadd.f32 %v420, %v414
  %v422 = vadd.f32 %v421, %v415
  %v423 = vadd.f32 %v422, %v416
  %v424 = vadd.f32 %v423, %v417
  %v425 = vrot.slane %v424, 4
  %v426 = vadd.f32 %v424, %v425
  %v427 = vrot.slane %v426, 2
  %v428 = vadd.f32 %v426, %v427
  %v429 = vrot.slane %v428, 1
  %v430 = vadd.f32 %v428, %v429
  %v431 = vld [vmem:[#allocation2] sm:$0x1]
  %433 = vset.pattern.permute.xlu0 0
  %434 = vperm.xlu0 %433, %v431
  %v435 = vpop.permute.xlu0 %434
  %v437 = vlaneseq
  %v438 = vshrl.u32 %v437, 7
  %v439 = vsub.s32 0, %v438
  %v440 = vrot.slane %v435, %v439
  %v441 = vadd.f32 %v430, %v440
  %442 = vst [vmem:[%s7] sm:$0x1] %v441
  // Predicated region
  $region30: #{drl_model_forward.1} parent=0 // pred_check
    _
  $region31: #{drl_model_forward.1} parent=0 // pred_check_branch
    %444 = sbr.rel (0) target = $region33
  $region32: #{drl_model_forward.1} parent=0 // pred_region
    _
  $region33: #{drl_model_forward.1} parent=0 // pred_fallthru
    _
  // Predicated region
  $region34: #{drl_model_forward.1} parent=0 // pred_check
    _
  $region35: #{drl_model_forward.1} parent=0 // pred_check_branch
    %446 = sbr.rel (0) target = $region37
  $region36: #{drl_model_forward.1} parent=0 // pred_region
    _
  $region37: #{drl_model_forward.1} parent=0 // pred_fallthru
    _

</llo_original>
